<compile_context>
chip_gen: v6e
topology: v6e:2x2x1
jax: 0.10.0
libtpu: 0.0.40
codegen_flags: <defaults>
</compile_context>

<pallas_src>
import functools

import jax
import jax.numpy as jnp
from jax.experimental import pallas as pl
from jax.experimental.pallas import tpu as pltpu


def _round_up(x, m):
    return ((x + m - 1) // m) * m


def _vmem_budget():
    """(double-buffered-input budget, vmem_limit_bytes) per TPU generation."""
    try:
        kind = jax.devices()[0].device_kind.lower()
    except Exception:
        kind = ""
    if "v5 lite" in kind or "v5e" in kind or "v5lite" in kind:
        return 20 << 20, 64 << 20          # 128 MiB physical, 16 MiB default scoped
    if "v7" in kind:
        return 18 << 20, 48 << 20          # 64 MiB physical per TC, 2 TCs
    if "v6" in kind:
        return 32 << 20, 96 << 20          # 128 MiB physical
    return 20 << 20, 64 << 20              # unknown: conservative


def _pick_tile(hw, num_classes, x_itemsize, lbl_itemsize):
    budget, vmem_limit = _vmem_budget()
    hw_ceil = _round_up(hw, 128)
    # double-buffered x + lbl tiles, plus two f32 accumulator rows per lane
    per_lane = 2 * (num_classes * x_itemsize + lbl_itemsize) + 2 * 4
    tile = max(128, (budget // per_lane) // 128 * 128)
    tile = min(tile, hw_ceil)
    num_tiles = pl.cdiv(hw_ceil, tile)
    tile = _round_up(pl.cdiv(hw_ceil, num_tiles), 128)   # rebalance ragged tail
    return tile, num_tiles, vmem_limit


def _logcosh_dice_kernel(fill_ref, x_ref, lbl_ref, out_ref, acc_i, acc_v, *,
                         hw, tile, ignore_index):
    # fill_ref: (1,)      int32 SMEM scalar: value to substitute for ignore_index
    # x_ref:    (C, T)    logits tile (classes on sublanes, pixels on lanes)
    # lbl_ref:  (1, T)    integer labels tile (native narrow dtype ok)
    # out_ref:  (1, 128)  per-batch partials: lane0=intersection, lane1=#labels
    # acc_i/v:  (1, T)    f32 lane-wise partial accumulators
    j = pl.program_id(1)

    @pl.when(j == 0)
    def _():
        acc_i[...] = jnp.zeros_like(acc_i)
        acc_v[...] = jnp.zeros_like(acc_v)

    x = x_ref[...].astype(jnp.float32)                  # (C, T); bf16 upcast ok
    lbl = lbl_ref[...].astype(jnp.int32)                # (1, T)
    num_classes = x.shape[0]

    # ignore_index remap fused per tile (fill == ignore_index means "no remap").
    lbl = jnp.where(lbl == ignore_index, fill_ref[0], lbl)

    # Softmax pieces over the class (sublane) axis; the normalized p is never
    # materialized -- we only need p[label] = e[label] / sum(e).
    m = jnp.max(x, axis=0, keepdims=True)               # (1, T)
    e = jnp.exp(x - m)                                  # (C, T)   (EUP)
    denom = jnp.sum(e, axis=0, keepdims=True)           # (1, T)
    cls = jax.lax.broadcasted_iota(jnp.int32, x.shape, 0)
    numer = jnp.sum(jnp.where(cls == lbl, e, 0.0),       # single select, no onehot mul
                    axis=0, keepdims=True)               # (1, T)

    # Ragged-tail mask: zero contributions of lanes past the real pixel count
    # via select (NOT multiply) so garbage/Inf in the tail cannot produce NaN.
    pix = j * tile + jax.lax.broadcasted_iota(jnp.int32, (1, tile), 1)
    tail_ok = pix < hw

    inter_lane = jnp.where(tail_ok, numer * pl.reciprocal(denom, approx=True), 0.0)
    label_ok = jnp.logical_and(lbl >= 0, lbl < num_classes)
    valid_lane = jnp.where(jnp.logical_and(tail_ok, label_ok), 1.0, 0.0)

    # Lane-wise VPU accumulation; cross-lane reduce deferred to the epilogue.
    acc_i[...] += inter_lane
    acc_v[...] += valid_lane

    @pl.when(j == pl.num_programs(1) - 1)
    def _():
        inter = jnp.sum(acc_i[...], axis=1, keepdims=True)   # (1, 1)
        valid = jnp.sum(acc_v[...], axis=1, keepdims=True)   # (1, 1)
        lane = jax.lax.broadcasted_iota(jnp.int32, (1, 128), 1)
        out_ref[...] = jnp.where(lane == 0, inter,
                                 jnp.where(lane == 1, valid, 0.0))


def log_cosh_dice_loss(logits_nchw, target_nhw, *, smooth=1.0, ignore_index=255):
    """Matches LogCoshDiceLoss(output, target) from the PyTorch reference."""
    N, C, H, W = logits_nchw.shape
    HW = H * W

    t = target_nhw
    if not jnp.issubdtype(t.dtype, jnp.integer):
        t = t.astype(jnp.int32)

    # --- ignore_index remap *decision* only (scalar glue, one fused read pass).
    # Faithfully reproduces the python range() quirk of the reference:
    # upper bound exclusive, so ignore_index == target.max() counts as
    # "not in range" and triggers the remap.
    tmin = jnp.min(t).astype(jnp.int32)
    tmax = jnp.max(t).astype(jnp.int32)
    not_in_range = jnp.logical_not(
        jnp.logical_and(ignore_index >= tmin, ignore_index < tmax))
    has_ignore = jnp.any(t == ignore_index)
    remap = jnp.logical_and(not_in_range, has_ignore)
    # fill value the kernel substitutes for ignore_index (== ignore_index -> no-op)
    fill = jnp.where(remap, tmin, jnp.int32(ignore_index)).reshape(1)

    # --- layout: NCHW -> (N, C, HW) is a free reshape (no transpose/pad copy) --
    x = logits_nchw.reshape(N, C, HW)
    lbl = t.reshape(N, 1, HW)

    tile, num_tiles, vmem_limit = _pick_tile(HW, C, x.dtype.itemsize,
                                             lbl.dtype.itemsize)

    kernel = functools.partial(_logcosh_dice_kernel, hw=HW, tile=tile,
                               ignore_index=int(ignore_index))

    cost = pl.CostEstimate(
        flops=8 * N * C * HW,
        transcendentals=N * C * HW,
        bytes_accessed=(N * C * HW * x.dtype.itemsize
                        + N * HW * lbl.dtype.itemsize + N * 128 * 4),
    )

    # TODO(synk): for N == 1 on v7x, additionally split the pixel-tile axis
    # across both TensorCores with per-core partials; here only the batch axis
    # is "parallel".
    partials = pl.pallas_call(
        kernel,
        out_shape=jax.ShapeDtypeStruct((N, 1, 128), jnp.float32),
        grid_spec=pltpu.PrefetchScalarGridSpec(
            num_scalar_prefetch=1,
            grid=(N, num_tiles),
            in_specs=[
                pl.BlockSpec((None, C, tile), lambda n, j, s: (n, 0, j)),
                pl.BlockSpec((None, 1, tile), lambda n, j, s: (n, 0, j)),
            ],
            out_specs=pl.BlockSpec((None, 1, 128), lambda n, j, s: (n, 0, 0)),
            scratch_shapes=[pltpu.VMEM((1, tile), jnp.float32),
                            pltpu.VMEM((1, tile), jnp.float32)],
        ),
        compiler_params=pltpu.CompilerParams(
            dimension_semantics=("parallel", "arbitrary"),
            vmem_limit_bytes=int(vmem_limit)),
        cost_estimate=cost,
    )(fill, x, lbl)

    inter = jnp.sum(partials[:, 0, 0])          # total intersection
    tsum = jnp.sum(partials[:, 0, 1])           # total one-hot sum (#labels in [0,C))
    osum = jnp.float32(N * HW)                  # sum(softmax) over real pixels
    dice = 1.0 - (2.0 * inter + smooth) / (osum + tsum + smooth)
    return jnp.log(jnp.cosh(dice))


def _reference_jax(logits_nchw, target_nhw, smooth=1.0, ignore_index=255):
    """Pure-JAX re-implementation of the PyTorch forward, for sanity check."""
    t = target_nhw.astype(jnp.int32)
    tmin = jnp.min(t)
    tmax = jnp.max(t)
    not_in_range = jnp.logical_not(
        jnp.logical_and(ignore_index >= tmin, ignore_index < tmax))
    has_ignore = jnp.any(t == ignore_index)
    remap = jnp.logical_and(not_in_range, has_ignore)
    t = jnp.where(jnp.logical_and(remap, t == ignore_index), tmin, t)

    C = logits_nchw.shape[1]
    onehot = jax.nn.one_hot(t, C, axis=1, dtype=jnp.float32)      # (N,C,H,W)
    probs = jax.nn.softmax(logits_nchw.astype(jnp.float32), axis=1)
    inter = jnp.sum(probs * onehot)
    dice = 1.0 - (2.0 * inter + smooth) / (jnp.sum(probs) + jnp.sum(onehot) + smooth)
    return jnp.log(jnp.cosh(dice))


if __name__ == "__main__":
    key = jax.random.PRNGKey(0)
    k1, k2, k3 = jax.random.split(key, 3)

    N, C, H, W = 2, 4, 16, 16
    logits = jax.random.normal(k1, (N, C, H, W), dtype=jnp.float32)
    target = jax.random.randint(k2, (N, H, W), 0, C, dtype=jnp.int32)
    # sprinkle a few ignore_index pixels to exercise the fused remap path
    ignore_mask = jax.random.uniform(k3, (N, H, W)) < 0.05
    target = jnp.where(ignore_mask, 255, target)

    loss = jax.block_until_ready(log_cosh_dice_loss(logits, target))
    ref = jax.block_until_ready(_reference_jax(logits, target))

    assert jnp.isfinite(loss), "kernel produced non-finite loss"
    assert abs(float(loss) - float(ref)) < 1e-3, (float(loss), float(ref))

    print("KERNEL_OK")
</pallas_src>

<mosaic_0001>
module attributes {stable_mosaic.version = 11 : i64} {
  func.func @_logcosh_dice_kernel(%arg0: i32, %arg1: i32, %arg2: memref<1xi32, #tpu.memory_space<smem>>, %arg3: memref<1x4x256xf32, #tpu.memory_space<vmem>>, %arg4: memref<1x1x256xi32, #tpu.memory_space<vmem>>, %arg5: memref<1x1x128xf32, #tpu.memory_space<vmem>>, %arg6: memref<1x256xf32, #tpu.memory_space<vmem>>, %arg7: memref<1x256xf32, #tpu.memory_space<vmem>>) attributes {dimension_semantics = [#tpu.dimension_semantics<parallel>, #tpu.dimension_semantics<arbitrary>], iteration_bounds = array<i64: 2, 1>, scalar_prefetch = 1 : i64, scratch_operands = 2 : i64, tpu.core_type = #tpu.core_type<tc>, window_params = [{transform_indices = @transform_0, window_bounds = array<i64: 1, 4, 256>}, {transform_indices = @transform_1, window_bounds = array<i64: 1, 1, 256>}, {transform_indices = @transform_2, window_bounds = array<i64: 1, 1, 128>}]} {
    %c0_i32 = arith.constant 0 : i32
    %0 = arith.cmpi eq, %arg1, %c0_i32 : i32
    %1 = arith.extui %0 : i1 to i32
    %c0_i32_0 = arith.constant 0 : i32
    %2 = arith.cmpi ne, %1, %c0_i32_0 : i32
    scf.if %2 {
      %cst_25 = arith.constant 0.000000e+00 : f32
      %54 = vector.broadcast %cst_25 : f32 to vector<1x256xf32>
      %c0_26 = arith.constant 0 : index
      %c0_27 = arith.constant 0 : index
      %55 = vector.load %arg6[%c0_26, %c0_27] : memref<1x256xf32, #tpu.memory_space<vmem>>, vector<1x256xf32>
      tpu.vector_store %arg6[%c0_26, %c0_27], %54 {strides = array<i32>} : memref<1x256xf32, #tpu.memory_space<vmem>>, vector<1x256xf32>,
      %cst_28 = arith.constant 0.000000e+00 : f32
      %56 = vector.broadcast %cst_28 : f32 to vector<1x256xf32>
      %c0_29 = arith.constant 0 : index
      %c0_30 = arith.constant 0 : index
      %57 = vector.load %arg7[%c0_29, %c0_30] : memref<1x256xf32, #tpu.memory_space<vmem>>, vector<1x256xf32>
      tpu.vector_store %arg7[%c0_29, %c0_30], %56 {strides = array<i32>} : memref<1x256xf32, #tpu.memory_space<vmem>>, vector<1x256xf32>,
    } else {
    }
    %c0 = arith.constant 0 : index
    %c0_1 = arith.constant 0 : index
    %c0_2 = arith.constant 0 : index
    %3 = vector.load %arg3[%c0, %c0_1, %c0_2] : memref<1x4x256xf32, #tpu.memory_space<vmem>>, vector<1x4x256xf32>
    %4 = vector.shape_cast %3 : vector<1x4x256xf32> to vector<4x256xf32>
    %c0_3 = arith.constant 0 : index
    %c0_4 = arith.constant 0 : index
    %c0_5 = arith.constant 0 : index
    %5 = vector.load %arg4[%c0_3, %c0_4, %c0_5] : memref<1x1x256xi32, #tpu.memory_space<vmem>>, vector<1x1x256xi32>
    %6 = vector.shape_cast %5 : vector<1x1x256xi32> to vector<1x256xi32>
    %c255_i32 = arith.constant 255 : i32
    %7 = vector.broadcast %c255_i32 : i32 to vector<1x256xi32>
    %8 = arith.cmpi eq, %6, %7 : vector<1x256xi32>
    %c0_6 = arith.constant 0 : index
    %9 = memref.load %arg2[%c0_6] : memref<1xi32, #tpu.memory_space<smem>>
    %10 = vector.broadcast %9 : i32 to vector<1x256xi32>
    %11 = arith.select %8, %10, %6 : vector<1x256xi1>, vector<1x256xi32>
    %cst = arith.constant dense<0xFF800000> : vector<256xf32>
    %12 = vector.multi_reduction <maximumf>, %4, %cst [0] : vector<4x256xf32> to vector<256xf32>
    %13 = vector.shape_cast %12 : vector<256xf32> to vector<1x256xf32>
    %14 = vector.broadcast %13 : vector<1x256xf32> to vector<4x256xf32>
    %15 = arith.subf %4, %14 : vector<4x256xf32>
    %16 = math.exp %15 : vector<4x256xf32>
    %cst_7 = arith.constant dense<0.000000e+00> : vector<256xf32>
    %17 = vector.multi_reduction <add>, %16, %cst_7 [0] : vector<4x256xf32> to vector<256xf32>
    %18 = vector.shape_cast %17 : vector<256xf32> to vector<1x256xf32>
    %19 = tpu.iota {dimensions = array<i32: 0>} : vector<4x256xi32>
    %20 = vector.broadcast %11 : vector<1x256xi32> to vector<4x256xi32>
    %21 = arith.cmpi eq, %19, %20 : vector<4x256xi32>
    %cst_8 = arith.constant 0.000000e+00 : f32
    %22 = vector.broadcast %cst_8 : f32 to vector<4x256xf32>
    %23 = arith.select %21, %16, %22 : vector<4x256xi1>, vector<4x256xf32>
    %cst_9 = arith.constant dense<0.000000e+00> : vector<256xf32>
    %24 = vector.multi_reduction <add>, %23, %cst_9 [0] : vector<4x256xf32> to vector<256xf32>
    %25 = vector.shape_cast %24 : vector<256xf32> to vector<1x256xf32>
    %c256_i32 = arith.constant 256 : i32
    %26 = arith.muli %arg1, %c256_i32 : i32
    %27 = tpu.iota {dimensions = array<i32: 1>} : vector<1x256xi32>
    %28 = vector.broadcast %26 : i32 to vector<1x256xi32>
    %29 = arith.addi %28, %27 : vector<1x256xi32>
    %c256_i32_10 = arith.constant 256 : i32
    %30 = vector.broadcast %c256_i32_10 : i32 to vector<1x256xi32>
    %31 = arith.cmpi slt, %29, %30 : vector<1x256xi32>
    %32 = tpu.reciprocal %18 {approx = true} : vector<1x256xf32> -> vector<1x256xf32>
    %33 = arith.mulf %25, %32 : vector<1x256xf32>
    %cst_11 = arith.constant 0.000000e+00 : f32
    %34 = vector.broadcast %cst_11 : f32 to vector<1x256xf32>
    %35 = arith.select %31, %33, %34 : vector<1x256xi1>, vector<1x256xf32>
    %c0_i32_12 = arith.constant 0 : i32
    %36 = vector.broadcast %c0_i32_12 : i32 to vector<1x256xi32>
    %37 = arith.cmpi sge, %11, %36 : vector<1x256xi32>
    %c4_i32 = arith.constant 4 : i32
    %38 = vector.broadcast %c4_i32 : i32 to vector<1x256xi32>
    %39 = arith.cmpi slt, %11, %38 : vector<1x256xi32>
    %40 = arith.andi %37, %39 : vector<1x256xi1>
    %41 = arith.andi %31, %40 : vector<1x256xi1>
    %cst_13 = arith.constant 1.000000e+00 : f32
    %cst_14 = arith.constant 0.000000e+00 : f32
    %42 = vector.broadcast %cst_13 : f32 to vector<1x256xf32>
    %43 = vector.broadcast %cst_14 : f32 to vector<1x256xf32>
    %44 = arith.select %41, %42, %43 : vector<1x256xi1>, vector<1x256xf32>
    %c0_15 = arith.constant 0 : index
    %c0_16 = arith.constant 0 : index
    %45 = vector.load %arg6[%c0_15, %c0_16] : memref<1x256xf32, #tpu.memory_space<vmem>>, vector<1x256xf32>
    %46 = arith.addf %45, %35 : vector<1x256xf32>
    %c0_17 = arith.constant 0 : index
    %c0_18 = arith.constant 0 : index
    %47 = vector.load %arg6[%c0_17, %c0_18] : memref<1x256xf32, #tpu.memory_space<vmem>>, vector<1x256xf32>
    tpu.vector_store %arg6[%c0_17, %c0_18], %46 {strides = array<i32>} : memref<1x256xf32, #tpu.memory_space<vmem>>, vector<1x256xf32>,
    %c0_19 = arith.constant 0 : index
    %c0_20 = arith.constant 0 : index
    %48 = vector.load %arg7[%c0_19, %c0_20] : memref<1x256xf32, #tpu.memory_space<vmem>>, vector<1x256xf32>
    %49 = arith.addf %48, %44 : vector<1x256xf32>
    %c0_21 = arith.constant 0 : index
    %c0_22 = arith.constant 0 : index
    %50 = vector.load %arg7[%c0_21, %c0_22] : memref<1x256xf32, #tpu.memory_space<vmem>>, vector<1x256xf32>
    tpu.vector_store %arg7[%c0_21, %c0_22], %49 {strides = array<i32>} : memref<1x256xf32, #tpu.memory_space<vmem>>, vector<1x256xf32>,
    %c0_i32_23 = arith.constant 0 : i32
    %51 = arith.cmpi eq, %arg1, %c0_i32_23 : i32
    %52 = arith.extui %51 : i1 to i32
    %c0_i32_24 = arith.constant 0 : i32
    %53 = arith.cmpi ne, %52, %c0_i32_24 : i32
    scf.if %53 {
      %c0_25 = arith.constant 0 : index
      %c0_26 = arith.constant 0 : index
      %54 = vector.load %arg6[%c0_25, %c0_26] : memref<1x256xf32, #tpu.memory_space<vmem>>, vector<1x256xf32>
      %cst_27 = arith.constant dense<0.000000e+00> : vector<1xf32>
      %55 = vector.multi_reduction <add>, %54, %cst_27 [1] : vector<1x256xf32> to vector<1xf32>
      %56 = vector.shape_cast %55 : vector<1xf32> to vector<1x1xf32>
      %c0_28 = arith.constant 0 : index
      %c0_29 = arith.constant 0 : index
      %57 = vector.load %arg7[%c0_28, %c0_29] : memref<1x256xf32, #tpu.memory_space<vmem>>, vector<1x256xf32>
      %cst_30 = arith.constant dense<0.000000e+00> : vector<1xf32>
      %58 = vector.multi_reduction <add>, %57, %cst_30 [1] : vector<1x256xf32> to vector<1xf32>
      %59 = vector.shape_cast %58 : vector<1xf32> to vector<1x1xf32>
      %60 = tpu.iota {dimensions = array<i32: 1>} : vector<1x128xi32>
      %c0_i32_31 = arith.constant 0 : i32
      %61 = vector.broadcast %c0_i32_31 : i32 to vector<1x128xi32>
      %62 = arith.cmpi eq, %60, %61 : vector<1x128xi32>
      %c1_i32 = arith.constant 1 : i32
      %63 = vector.broadcast %c1_i32 : i32 to vector<1x128xi32>
      %64 = arith.cmpi eq, %60, %63 : vector<1x128xi32>
      %cst_32 = arith.constant 0.000000e+00 : f32
      %65 = vector.shape_cast %59 : vector<1x1xf32> to vector<1x1xf32>
      %66 = vector.broadcast %65 : vector<1x1xf32> to vector<1x128xf32>
      %67 = vector.broadcast %cst_32 : f32 to vector<1x128xf32>
      %68 = arith.select %64, %66, %67 : vector<1x128xi1>, vector<1x128xf32>
      %69 = vector.shape_cast %56 : vector<1x1xf32> to vector<1x1xf32>
      %70 = vector.broadcast %69 : vector<1x1xf32> to vector<1x128xf32>
      %71 = arith.select %62, %70, %68 : vector<1x128xi1>, vector<1x128xf32>
      %c0_33 = arith.constant 0 : index
      %c0_34 = arith.constant 0 : index
      %c0_35 = arith.constant 0 : index
      %72 = vector.load %arg5[%c0_33, %c0_34, %c0_35] : memref<1x1x128xf32, #tpu.memory_space<vmem>>, vector<1x1x128xf32>
      %73 = vector.shape_cast %72 : vector<1x1x128xf32> to vector<1x128xf32>
      %74 = vector.shape_cast %71 : vector<1x128xf32> to vector<1x1x128xf32>
      tpu.vector_store %arg5[%c0_33, %c0_34, %c0_35], %74 {strides = array<i32>} : memref<1x1x128xf32, #tpu.memory_space<vmem>>, vector<1x1x128xf32>,
    } else {
    }
    return
  }
  func.func @transform_0(%arg0: i32, %arg1: i32, %arg2: memref<1xi32, #tpu.memory_space<smem>>) -> (i32, i32, i32) {
    %c0_i32 = arith.constant 0 : i32
    %c0_i32_0 = arith.constant 0 : i32
    return %arg0, %c0_i32, %arg1 : i32, i32, i32
  }
  func.func @transform_1(%arg0: i32, %arg1: i32, %arg2: memref<1xi32, #tpu.memory_space<smem>>) -> (i32, i32, i32) {
    %c0_i32 = arith.constant 0 : i32
    %c0_i32_0 = arith.constant 0 : i32
    return %arg0, %c0_i32, %arg1 : i32, i32, i32
  }
  func.func @transform_2(%arg0: i32, %arg1: i32, %arg2: memref<1xi32, #tpu.memory_space<smem>>) -> (i32, i32, i32) {
    %c0_i32 = arith.constant 0 : i32
    %c0_i32_0 = arith.constant 0 : i32
    %c0_i32_1 = arith.constant 0 : i32
    return %arg0, %c0_i32, %c0_i32_0 : i32, i32, i32
  }
}

</mosaic_0001>

<llo_original>
// kernel: tpu_custom_call.1
$region0: #{tpu_custom_call.1}
  #allocation0 [shape = 'u32[]', space=smem, size = 0x4, offset = 0x4, fixed_abs, tag = 'smem constant byte address 0x4 - core index']
  #allocation1 [shape = 'u32[144,128]{1,0:T(1,128)}', space=vmem, size = 0x12000, scoped, tag = 'internal scratch']
  #allocation2 [shape = 'f32[1,256]{1,0:T(1,128)}', space=vmem, size = 0x400, scoped, tag = 'scratch operand']
  #allocation3 [shape = 'f32[1,256]{1,0:T(1,128)}', space=vmem, size = 0x400, scoped, tag = 'scratch operand']
  #allocation4 [shape = 's32[1]{0}', space=sflag, size = 0x4, scoped, tag = 'scoped memory for tpu_custom_call.1']
  #allocation5 [shape = 's32[1]{0:T(128)S(6)}', space=smem, size = 0x200, scoped, tag = 'prefetched SMEM operand 0']
  %s0 = inlined_call_operand.<no memory space> [shape: s32[1], index: 0, kind: input, shape index: {}]
  %s1 = inlined_call_operand.hbm [shape: f32[2,4,256], index: 1, kind: input, shape index: {}]
  %s2 = inlined_call_operand.hbm [shape: s32[2,1,256], index: 2, kind: input, shape index: {}]
  %s3 = inlined_call_operand.hbm [shape: f32[2,1,128], index: 3, kind: output, shape index: {}]
  %s4 = sld [smem:[#allocation0]]
  $region57: #{tpu_custom_call.1} parent=0
    _
  %s6 = ssub.s32 1, %s4
  %s7 = scalar_select 0, %s6, %s4
  %8 = sst [smem:[#allocation5]] %s0
  $region1: #{tpu_custom_call.1} parent=0
    #allocation6 [shape = 'u8[8192]{0}', space=vmem, size = 0x2000, scoped, tag = 'input window, operand 1']
    #allocation7 [shape = 's32[2]{0}', space=sflag, size = 0x8, scoped, tag = 'scoped memory for tpu_custom_call.1']
    #allocation8 [shape = 's32[2]{0}', space=sflag, size = 0x8, scoped, tag = 'scoped memory for tpu_custom_call.1']
    #allocation9 [shape = 'u8[2048]{0}', space=vmem, size = 0x800, scoped, tag = 'input window, operand 2']
    #allocation10 [shape = 's32[2]{0}', space=sflag, size = 0x8, scoped, tag = 'scoped memory for tpu_custom_call.1']
    #allocation11 [shape = 'u8[1024]{0}', space=vmem, size = 0x400, scoped, tag = 'output window, operand 0']
    %9 = vsyncpa [#allocation7], 0
    %s10 = scalar_lea.sflag [#allocation7], 1
    %11 = vsyncpa %s10, 0
    %12 = vsyncpa [#allocation10], 0
    %s13 = scalar_lea.sflag [#allocation10], 1
    %14 = vsyncpa %s13, 0
    %15 = vsyncpa [#allocation8], 0
    %s16 = scalar_lea.sflag [#allocation8], 1
    %17 = vsyncpa %s16, 0
    loop: start=0, step=1, limit=4
    $region2: #{tpu_custom_call.1} parent=1 // loop_pre_header
      _
    $region3: #{tpu_custom_call.1} parent=1 // loop_header
      %s19 = sphi 0, %s23
      %p20 = scmp.ge.s32.totalorder %s19, 4
      %s26 = sphi 0, %s38
      %s27 = sphi 0, %s34
      %s28 = sphi 0, %s26
      %s29 = sphi 0, %s27
      %s30 = sphi 0, %s28
      %s31 = sphi 0, %s29
      %s43 = sphi 0, %s45
      %s46 = sphi 0, %s43
      %s47 = sphi 0, %s46
      %s63 = sphi 0, %s47
      %s71 = sphi 0, %s73
      %s74 = sphi 0, %s71
      %s75 = sphi 0, %s74
      %s91 = sphi 0, %s75
      %s97 = sphi 0, %s99
      %s100 = sphi 0, %s97
      %s101 = sphi 0, %s100
      %s117 = sphi 0, %s101
    $region4: #{tpu_custom_call.1} parent=1 // loop_header_branch
      %22 = sbr.rel (%p20) target = $region8
    $region5: #{tpu_custom_call.1} parent=1 // loop_body
      %s24 = ssub.s32 %s19, 1
      %s25 = ssub.s32 %s19, 2
      %s32 = sadd.s32 1, %s27
      %p33 = scmp.ge.s32.totalorder %s32, 1
      %s34 = scalar_select %p33, 0, %s32
      %s35 = sadd.s32 1, %s26
      %s36 = scalar_select %p33, %s35, %s26
      %p37 = scmp.ge.s32.totalorder %s36, 2
      %s38 = scalar_select %p37, 0, %s36
      %s39 = ssub.s32 %s26, %s38
      %s40 = ssub.s32 %s27, %s34
      %s41 = sor.u32 %s39, %s40
      %p42 = scmp.eq.s32.totalorder %s41, 0
      %s44 = sadd.s32 %s43, 1
      %s45 = scalar_select %p42, %s43, %s44
      %p48 = pneg %p42
      %p49 = scmp.eq.s32.totalorder %s19, 1
      %p50 = por %p48, %p49
      %p51 = scmp.ne.s32.totalorder %s43, %s46
      %p52 = scmp.eq.s32.totalorder %s19, 0
      %p53 = por %p51, %p52
      %p54 = scmp.ne.s32.totalorder %s43, %s46
      %p55 = scmp.eq.s32.totalorder %s24, 1
      %p56 = por %p54, %p55
      %p57 = scmp.ne.s32.totalorder %s46, %s47
      %p58 = scmp.eq.s32.totalorder %s24, 0
      %p59 = por %p57, %p58
      %p60 = scmp.ne.s32.totalorder %s46, %s47
      %p61 = scmp.eq.s32.totalorder %s25, 1
      %p62 = por %p60, %p61
      %p64 = scmp.ne.s32.totalorder %s47, %s63
      %p65 = scmp.eq.s32.totalorder %s25, 0
      %p66 = por %p64, %p65
      %s67 = ssub.s32 %s26, %s38
      %s68 = ssub.s32 %s27, %s34
      %s69 = sor.u32 %s67, %s68
      %p70 = scmp.eq.s32.totalorder %s69, 0
      %s72 = sadd.s32 %s71, 1
      %s73 = scalar_select %p70, %s71, %s72
      %p76 = pneg %p70
      %p77 = scmp.eq.s32.totalorder %s19, 1
      %p78 = por %p76, %p77
      %p79 = scmp.ne.s32.totalorder %s71, %s74
      %p80 = scmp.eq.s32.totalorder %s19, 0
      %p81 = por %p79, %p80
      %p82 = scmp.ne.s32.totalorder %s71, %s74
      %p83 = scmp.eq.s32.totalorder %s24, 1
      %p84 = por %p82, %p83
      %p85 = scmp.ne.s32.totalorder %s74, %s75
      %p86 = scmp.eq.s32.totalorder %s24, 0
      %p87 = por %p85, %p86
      %p88 = scmp.ne.s32.totalorder %s74, %s75
      %p89 = scmp.eq.s32.totalorder %s25, 1
      %p90 = por %p88, %p89
      %p92 = scmp.ne.s32.totalorder %s75, %s91
      %p93 = scmp.eq.s32.totalorder %s25, 0
      %p94 = por %p92, %p93
      %s95 = ssub.s32 %s26, %s38
      %p96 = scmp.eq.s32.totalorder %s95, 0
      %s98 = sadd.s32 %s97, 1
      %s99 = scalar_select %p96, %s97, %s98
      %p102 = pneg %p96
      %p103 = scmp.eq.s32.totalorder %s19, 1
      %p104 = por %p102, %p103
      %p105 = scmp.ne.s32.totalorder %s97, %s100
      %p106 = scmp.eq.s32.totalorder %s19, 0
      %p107 = por %p105, %p106
      %p108 = scmp.ne.s32.totalorder %s97, %s100
      %p109 = scmp.eq.s32.totalorder %s24, 1
      %p110 = por %p108, %p109
      %p111 = scmp.ne.s32.totalorder %s100, %s101
      %p112 = scmp.eq.s32.totalorder %s24, 0
      %p113 = por %p111, %p112
      %p114 = scmp.ne.s32.totalorder %s100, %s101
      %p115 = scmp.eq.s32.totalorder %s25, 1
      %p116 = por %p114, %p115
      %p118 = scmp.ne.s32.totalorder %s101, %s117
      %p119 = scmp.eq.s32.totalorder %s25, 0
      %p120 = por %p118, %p119
      %p121 = scmp.le.s32.totalorder 1, %s19
      %p122 = scmp.lt.s32.totalorder %s19, 3
      %p123 = pnand %p121, %p122
      %p124 = pneg %p123
      // Predicated region
      $region9: #{tpu_custom_call.1} parent=5 // pred_check
        _
      $region10: #{tpu_custom_call.1} parent=5 // pred_check_branch
        %126 = sbr.rel (%p123) target = $region12
      $region11: #{tpu_custom_call.1} parent=5 // pred_region
        %s127 = ssub.s32 %s19, 1
      $region12: #{tpu_custom_call.1} parent=5 // pred_fallthru
        _
      %p128 = scmp.lt.s32.totalorder %s19, 2
      // Predicated region
      $region13: #{tpu_custom_call.1} parent=5 // pred_check
        %p129 = pneg %p128
      $region14: #{tpu_custom_call.1} parent=5 // pred_check_branch
        %131 = sbr.rel (%p129) target = $region16
      $region15: #{tpu_custom_call.1} parent=5 // pred_region
        // Predicated region
        $region17: #{tpu_custom_call.1} parent=15 // pred_check
          %p132 = pneg %p53
        $region18: #{tpu_custom_call.1} parent=15 // pred_check_branch
          %134 = sbr.rel (%p132) target = $region20
        $region19: #{tpu_custom_call.1} parent=15 // pred_region
          %s135 = sand.u32 %s43, 1
          %s136 = scalar_lea.sflag [#allocation7], %s135
          %s137 = sand.u32 %s43, 1
          %s138 = smul.addr %s137, 8
          %s139 = scalar_lea.vmem [#allocation6], %s138
          %s140 = smul.u32 2, %s27
          %s142 = ssub.s32 128, 128
          %143 = vsyncadd %s136, %s142
          %s144 = smul.addr %s26, 2
          %s145 = sadd.s32 %s140, %s144
          %s146 = smul.addr %s145, 64
          %s147 = scalar_lea.hbm %s1, %s146
          %s149 = sshll.u32 %s139, 4
          %s150 = int_to_ptr.vmem [resolvable:$true] %s149
          %152 = dma.hbm_to_vmem [thread:$0]  %s147, 128, %s150, %s136
        $region20: #{tpu_custom_call.1} parent=15 // pred_fallthru
          _
        // Predicated region
        $region21: #{tpu_custom_call.1} parent=15 // pred_check
          %p153 = pneg %p81
        $region22: #{tpu_custom_call.1} parent=15 // pred_check_branch
          %155 = sbr.rel (%p153) target = $region24
        $region23: #{tpu_custom_call.1} parent=15 // pred_region
          %s156 = sand.u32 %s71, 1
          %s157 = scalar_lea.sflag [#allocation10], %s156
          %s158 = sand.u32 %s71, 1
          %s159 = smul.addr %s158, 2
          %s160 = scalar_lea.vmem [#allocation9], %s159
          %s161 = smul.u32 2, %s27
          %s163 = ssub.s32 32, 32
          %164 = vsyncadd %s157, %s163
          %s165 = smul.addr %s26, 2
          %s166 = sadd.s32 %s161, %s165
          %s167 = smul.addr %s166, 16
          %s168 = scalar_lea.hbm %s2, %s167
          %s170 = sshll.u32 %s160, 4
          %s171 = int_to_ptr.vmem [resolvable:$true] %s170
          %173 = dma.hbm_to_vmem [thread:$0]  %s168, 32, %s171, %s157
        $region24: #{tpu_custom_call.1} parent=15 // pred_fallthru
          _
      $region16: #{tpu_custom_call.1} parent=5 // pred_fallthru
        _
      %p174 = scmp.le.s32.totalorder 1, %s19
      %p175 = scmp.lt.s32.totalorder %s19, 3
      %p176 = pnand %p174, %p175
      %p177 = pneg %p176
      // Predicated region
      $region25: #{tpu_custom_call.1} parent=5 // pred_check
        _
      $region26: #{tpu_custom_call.1} parent=5 // pred_check_branch
        %179 = sbr.rel (%p176) target = $region28
      $region27: #{tpu_custom_call.1} parent=5 // pred_region
        %s180 = ssub.s32 %s19, 1
        %s181 = sand.u32 %s46, 1
        %s182 = scalar_lea.sflag [#allocation7], %s181
        %s183 = sand.u32 %s46, 1
        %s184 = smul.addr %s183, 8
        %s185 = scalar_lea.vmem [#allocation6], %s184
        // Predicated region
        $region29: #{tpu_custom_call.1} parent=27 // pred_check
          %p186 = pneg %p59
        $region30: #{tpu_custom_call.1} parent=27 // pred_check_branch
          %188 = sbr.rel (%p186) target = $region32
        $region31: #{tpu_custom_call.1} parent=27 // pred_region
          %189 = dma.done %s182, 128
        $region32: #{tpu_custom_call.1} parent=27 // pred_fallthru
          _
        %s190 = sand.u32 %s74, 1
        %s191 = scalar_lea.sflag [#allocation10], %s190
        %s192 = sand.u32 %s74, 1
        %s193 = smul.addr %s192, 2
        %s194 = scalar_lea.vmem [#allocation9], %s193
        // Predicated region
        $region33: #{tpu_custom_call.1} parent=27 // pred_check
          %p195 = pneg %p87
        $region34: #{tpu_custom_call.1} parent=27 // pred_check_branch
          %197 = sbr.rel (%p195) target = $region36
        $region35: #{tpu_custom_call.1} parent=27 // pred_region
          %198 = dma.done %s191, 32
        $region36: #{tpu_custom_call.1} parent=27 // pred_fallthru
          _
        %s199 = sand.u32 %s46, 1
        %s200 = scalar_lea.sflag [#allocation7], %s199
        %s201 = sand.u32 %s46, 1
        %s202 = smul.addr %s201, 8
        %s203 = scalar_lea.vmem [#allocation6], %s202
        %p204 = pneg %p59
        %p205 = pneg %p56
        %s206 = sand.u32 %s74, 1
        %s207 = scalar_lea.sflag [#allocation10], %s206
        %s208 = sand.u32 %s74, 1
        %s209 = smul.addr %s208, 2
        %s210 = scalar_lea.vmem [#allocation9], %s209
        %p211 = pneg %p87
        %p212 = pneg %p84
        %p213 = pneg %p113
        %p214 = pneg %p110
        %s215 = sand.u32 %s100, 1
        %s216 = scalar_lea.sflag [#allocation8], %s215
        %s217 = sand.u32 %s100, 1
        %s218 = scalar_lea.vmem [#allocation11], %s217
        %s219 = smul.u32 2, %s29
        %s220 = smul.u32 2, %s29
        %p221 = scmp.eq.s32.totalorder %s29, 0
        // Predicated region
        $region37: #{tpu_custom_call.1} parent=27 // pred_check
          %p222 = pneg %p221
        $region38: #{tpu_custom_call.1} parent=27 // pred_check_branch
          %224 = sbr.rel (%p222) target = $region40
        $region39: #{tpu_custom_call.1} parent=27 // pred_region
          %v225 = vlaneseq
          %vm226 = vcmp.ge.s32.totalorder %v225, 0
          %vm227 = vcmp.lt.s32.totalorder %v225, 256
          %vm228 = vmand %vm226, %vm227
          %229 = vst.msk [vmem:[#allocation2] sm:$0x3] %vm228, 0.0
          %230 = vst.msk [vmem:[#allocation3] sm:$0x3] %vm228, 0.0
        $region40: #{tpu_custom_call.1} parent=27 // pred_fallthru
          _
        %v231 = vld [vmem:[%s185] sm:$0xff]
        %v232 = vld [vmem:[%s194] sm:$0x3]
        %vm233 = vcmp.eq.s32.totalorder %v232, 255
        %s234 = sld [smem:[#allocation5]]
        %v235 = vstv %s234
        %v236 = vsel %vm233, %v235, %v232
        %v238 = vcombine.high %v231, %v231
        %vm240 = vcmask 1043456
        %v241 = vsel %vm240, %v231, -inf
        %v242 = vrot.slane %v241, 4
        %v243 = vmax.f32 %v241, %v242
        %v244 = vrot.slane %v243, 2
        %v245 = vmax.f32 %v243, %v244
        %v246 = vrot.slane %v245, 1
        %v247 = vmax.f32 %v245, %v246
        %v248 = vsel %vm240, %v238, -inf
        %v249 = vrot.slane %v248, 4
        %v250 = vmax.f32 %v248, %v249
        %v251 = vrot.slane %v250, 2
        %v252 = vmax.f32 %v250, %v251
        %v253 = vrot.slane %v252, 1
        %v254 = vmax.f32 %v252, %v253
        %v257 = vcombine.low %v247, %v254
        %v259 = vsub.f32 %v231, %v257
        %v260 = vmul.f32 %v259, 1.442695
        %v261 = vpow.pop %v260
        %v263 = vcombine.high %v261, %v261
        %v265 = vsel %vm240, %v261, 0.0
        %v266 = vrot.slane %v265, 4
        %v267 = vadd.f32 %v265, %v266
        %v268 = vrot.slane %v267, 2
        %v269 = vadd.f32 %v267, %v268
        %v270 = vrot.slane %v269, 1
        %v271 = vadd.f32 %v269, %v270
        %v272 = vsel %vm240, %v263, 0.0
        %v273 = vrot.slane %v272, 4
        %v274 = vadd.f32 %v272, %v273
        %v275 = vrot.slane %v274, 2
        %v276 = vadd.f32 %v274, %v275
        %v277 = vrot.slane %v276, 1
        %v278 = vadd.f32 %v276, %v277
        %v279 = vlaneseq
        %v280 = vshrl.u32 %v279, 7
        %v281 = vlaneseq
        %v282 = vshrl.u32 %v281, 7
        %v283 = vsub.s32 0, %v282
        %v284 = vrot.slane %v236, %v283
        %v285 = vlaneseq
        %v286 = vshrl.u32 %v285, 7
        %v287 = vsub.s32 1, %v286
        %v288 = vrot.slane %v236, %v287
        %vm289 = vcmp.eq.s32.totalorder %v280, %v284
        %vm290 = vcmp.eq.s32.totalorder %v280, %v288
        %v291 = vsel %vm289, %v261, 0.0
        %v292 = vsel %vm290, %v263, 0.0
        %v293 = vsel %vm240, %v291, 0.0
        %v294 = vrot.slane %v293, 4
        %v295 = vadd.f32 %v293, %v294
        %v296 = vrot.slane %v295, 2
        %v297 = vadd.f32 %v295, %v296
        %v298 = vrot.slane %v297, 1
        %v299 = vadd.f32 %v297, %v298
        %v300 = vsel %vm240, %v292, 0.0
        %v301 = vrot.slane %v300, 4
        %v302 = vadd.f32 %v300, %v301
        %v303 = vrot.slane %v302, 2
        %v304 = vadd.f32 %v302, %v303
        %v305 = vrot.slane %v304, 1
        %v306 = vadd.f32 %v304, %v305
        %s307 = smul.u32 %s29, 256
        %v308 = vlaneseq
        %v309 = vand.u32 %v308, 127
        %v310 = vadd.s32 %v309, 128
        %v311 = vstv %s307
        %v312 = vadd.s32 %v311, %v309
        %v313 = vadd.s32 %v311, %v310
        %vm314 = vcmp.lt.s32.totalorder %v312, 256
        %vm315 = vcmp.lt.s32.totalorder %v313, 256
        %v316 = vrcp.pop %v271
        %v317 = vrcp.pop %v278
        %v318 = vmul.f32 %v299, %v316
        %v319 = vmul.f32 %v306, %v317
        %v320 = vsel %vm314, %v318, 0.0
        %v321 = vsel %vm315, %v319, 0.0
        %vm322 = vcmp.ge.s32.totalorder %v236, 0
        %vm323 = vcmp.lt.s32.totalorder %v236, 4
        %vm324 = vmand %vm322, %vm323
        %v325 = vsel %vm324, 1, 0
        %v326 = vlaneseq
        %v327 = vshrl.u32 %v326, 7
        %v328 = vsub.s32 0, %v327
        %v329 = vrot.slane %v325, %v328
        %v330 = vlaneseq
        %v331 = vshrl.u32 %v330, 7
        %v332 = vsub.s32 1, %v331
        %v333 = vrot.slane %v325, %v332
        %vm334 = vcmp.ne.s32.totalorder %v329, 0
        %vm335 = vcmp.ne.s32.totalorder %v333, 0
        %vm336 = vmand %vm314, %vm334
        %vm337 = vmand %vm315, %vm335
        %v338 = vsel %vm336, 1.0, 0.0
        %v339 = vsel %vm337, 1.0, 0.0
        %v340 = vld [vmem:[#allocation2] sm:$0x3]
        %v343 = vcombine.low %v320, %v321
        %v345 = vunpack.c.l.s4 1966171168
        %v346 = vunpack.c.0.s8 %v345
        %v347 = vlaneseq
        %v348 = vshrl.u32 %v347, 7
        %v349 = vsub.s32 %v346, %v348
        %v350 = vrot.slane %v343, %v349
        %v352 = vunpack.c.l.s4 1966171168
        %v353 = vunpack.c.0.s8 %v352
        %v354 = vlaneseq
        %v355 = vshrl.u32 %v354, 7
        %v356 = vsub.s32 %v353, %v355
        %v357 = vrot.slane %v350, %v356
        %v359 = vadd.f32 %v340, %v357
        %v360 = vlaneseq
        %vm361 = vcmp.ge.s32.totalorder %v360, 0
        %vm362 = vcmp.lt.s32.totalorder %v360, 256
        %vm363 = vmand %vm361, %vm362
        %364 = vst.msk [vmem:[#allocation2] sm:$0x3] %vm363, %v359
        %v365 = vld [vmem:[#allocation3] sm:$0x3]
        %v368 = vcombine.low %v338, %v339
        %v370 = vunpack.c.l.s4 1966171168
        %v371 = vunpack.c.0.s8 %v370
        %v372 = vlaneseq
        %v373 = vshrl.u32 %v372, 7
        %v374 = vsub.s32 %v371, %v373
        %v375 = vrot.slane %v368, %v374
        %v377 = vunpack.c.l.s4 1966171168
        %v378 = vunpack.c.0.s8 %v377
        %v379 = vlaneseq
        %v380 = vshrl.u32 %v379, 7
        %v381 = vsub.s32 %v378, %v380
        %v382 = vrot.slane %v375, %v381
        %v384 = vadd.f32 %v365, %v382
        %385 = vst.msk [vmem:[#allocation3] sm:$0x3] %vm363, %v384
        // Predicated region
        $region41: #{tpu_custom_call.1} parent=27 // pred_check
          %p386 = pneg %p221
        $region42: #{tpu_custom_call.1} parent=27 // pred_check_branch
          %388 = sbr.rel (%p386) target = $region44
        $region43: #{tpu_custom_call.1} parent=27 // pred_region
          %v389 = vld [vmem:[#allocation2] sm:$0x3]
          %v391 = vlaneseq
          %v392 = vshrl.u32 %v391, 7
          %v393 = vsub.s32 0, %v392
          %v394 = vrot.slane %v389, %v393
          %v395 = vlaneseq
          %v396 = vshrl.u32 %v395, 7
          %v397 = vsub.s32 1, %v396
          %v398 = vrot.slane %v389, %v397
          %vm401 = vcmask 1040384
          %v402 = vsel %vm401, %v394, 0.0
          %v403 = vsel %vm401, %v398, 0.0
          %v404 = vadd.f32 %v402, %v403
          %405 = vadd.xlane.f32.xlu0 %v404
          %v406 = vpop.xlane.xlu0 %405
          %v407 = vld [vmem:[#allocation3] sm:$0x3]
          %v409 = vlaneseq
          %v410 = vshrl.u32 %v409, 7
          %v411 = vsub.s32 0, %v410
          %v412 = vrot.slane %v407, %v411
          %v413 = vlaneseq
          %v414 = vshrl.u32 %v413, 7
          %v415 = vsub.s32 1, %v414
          %v416 = vrot.slane %v407, %v415
          %v419 = vsel %vm401, %v412, 0.0
          %v420 = vsel %vm401, %v416, 0.0
          %v421 = vadd.f32 %v419, %v420
          %422 = vadd.xlane.f32.xlu0 %v421
          %v423 = vpop.xlane.xlu0 %422
          %vm424 = vcmp.eq.s32.totalorder %v309, 0
          %vm425 = vcmp.eq.s32.totalorder %v309, 1
          %v426 = vsel %vm425, %v423, 0.0
          %v427 = vsel %vm424, %v406, %v426
          %428 = vst [vmem:[%s218] sm:$0x1] %v427
        $region44: #{tpu_custom_call.1} parent=27 // pred_fallthru
          _
        %s429 = sand.u32 %s100, 1
        %s430 = scalar_lea.sflag [#allocation8], %s429
        %s431 = sand.u32 %s100, 1
        %s432 = scalar_lea.vmem [#allocation11], %s431
        // Predicated region
        $region45: #{tpu_custom_call.1} parent=27 // pred_check
          %p433 = pneg %p110
        $region46: #{tpu_custom_call.1} parent=27 // pred_check_branch
          %435 = sbr.rel (%p433) target = $region48
        $region47: #{tpu_custom_call.1} parent=27 // pred_region
          %s437 = ssub.s32 16, 16
          %438 = vsyncadd %s430, %s437
          %s439 = smul.addr %s28, 16
          %s440 = scalar_lea.hbm %s3, %s439
          %s442 = sshll.u32 %s432, 4
          %s443 = int_to_ptr.vmem [resolvable:$true] %s442
          %445 = dma.vmem_to_hbm [thread:$0]  %s443, 16, %s440, %s430
        $region48: #{tpu_custom_call.1} parent=27 // pred_fallthru
          _
      $region28: #{tpu_custom_call.1} parent=5 // pred_fallthru
        _
      %p446 = scmp.le.s32.totalorder 2, %s19
      // Predicated region
      $region49: #{tpu_custom_call.1} parent=5 // pred_check
        %p447 = pneg %p446
      $region50: #{tpu_custom_call.1} parent=5 // pred_check_branch
        %449 = sbr.rel (%p447) target = $region52
      $region51: #{tpu_custom_call.1} parent=5 // pred_region
        %s450 = ssub.s32 %s19, 2
        // Predicated region
        $region53: #{tpu_custom_call.1} parent=51 // pred_check
          %p451 = pneg %p116
        $region54: #{tpu_custom_call.1} parent=51 // pred_check_branch
          %453 = sbr.rel (%p451) target = $region56
        $region55: #{tpu_custom_call.1} parent=51 // pred_region
          %s454 = sand.u32 %s101, 1
          %s455 = scalar_lea.sflag [#allocation8], %s454
          %s456 = sand.u32 %s101, 1
          %s457 = scalar_lea.vmem [#allocation11], %s456
          %458 = dma.done %s455, 16
        $region56: #{tpu_custom_call.1} parent=51 // pred_fallthru
          _
      $region52: #{tpu_custom_call.1} parent=5 // pred_fallthru
        _
    $region6: #{tpu_custom_call.1} parent=1 // loop_footer
      %s23 = sadd.s32 1, %s19
    $region7: #{tpu_custom_call.1} parent=1 // loop_footer_branch
      %18 = sbr.rel target = $region3
    $region8: #{tpu_custom_call.1} parent=1 // loop_exit
      _
    %459 = vsyncpa [#allocation7], 1
    %s460 = scalar_lea.sflag [#allocation7], 1
    %461 = vsyncpa %s460, 1
    %462 = vsyncpa [#allocation10], 1
    %s463 = scalar_lea.sflag [#allocation10], 1
    %464 = vsyncpa %s463, 1
    %465 = vsyncpa [#allocation8], 1
    %s466 = scalar_lea.sflag [#allocation8], 1
    %467 = vsyncpa %s466, 1

</llo_original>
